<compile_context>
chip_gen: v6e
topology: v6e:2x2x1
jax: 0.10.0
libtpu: 0.0.40
codegen_flags: <defaults>
</compile_context>

<pallas_src>
import functools
import math

import jax
import jax.numpy as jnp
from jax import lax
from jax.experimental import pallas as pl
from jax.experimental.pallas import tpu as pltpu


def _round_up(x, m):
    return ((x + m - 1) // m) * m


def _ph_frame_kernel(feat_ref, w_ref, b_ref, out_ref, *, inv_temp, clamp_val):
    # feat_ref: [rows, Hp]  (bf16 or f32)   w_ref: [Hp, Cp]   b_ref: [1, Cp] f32
    # out_ref:  [rows, Cp]  f32
    logits = jnp.dot(feat_ref[...], w_ref[...],
                     preferred_element_type=jnp.float32)        # MXU, f32 accum
    logits = (logits + b_ref[...]) * inv_temp                   # bias + /temperature
    # clamp only lane 0 (ph_bd channel); the rest passes through unclamped
    lane = lax.broadcasted_iota(jnp.int32, logits.shape, 1)
    clamped = jnp.clip(logits, -clamp_val, clamp_val)
    out_ref[...] = jnp.where(lane == 0, clamped, logits).astype(out_ref.dtype)


def init_params(key, H, C):
    # nn.init.kaiming_normal_(weight, mode='fan_in') on a [C, H] weight:
    #   std = sqrt(2 / fan_in) = sqrt(2 / H); bias = 0.
    # Stored transposed ([H, C]) so the kernel computes y = x @ w + b.
    std = math.sqrt(2.0 / H)
    w = jax.random.normal(key, (H, C), jnp.float32) * std
    b = jnp.zeros((C,), jnp.float32)
    return dict(w=w, b=b)


def ph_frame_predictor_forward(feat, params, hparams, *, train=False,
                               mxu_bf16=True, row_tile=256):
    B, T, H = feat.shape
    ph_num = hparams.get('ph_num', 58)
    C = ph_num + 3
    temp = max(1e-7, hparams.get('ph_bd_temperature', 1.0))
    # TODO(synk): training-time dropout (p > 0) not implemented; hparams dropout
    # defaults to 0.0, which makes F.dropout the identity (matches eval path).

    # ---- padded / folded layout -------------------------------------------
    Hp = _round_up(H, 128)                 # lane/K alignment for the MXU
    Cp = _round_up(C, 128)                 # lane-dense output stores
    BT = B * T
    rows = min(row_tile, _round_up(BT, 8)) # sublane-aligned row tile
    BTp = _round_up(BT, rows)

    compute_dtype = jnp.bfloat16 if mxu_bf16 else jnp.float32

    feat2d = feat.reshape(BT, H)
    feat2d = jnp.pad(feat2d, ((0, BTp - BT), (0, Hp - H))).astype(compute_dtype)
    w_p = jnp.pad(params['w'], ((0, Hp - H), (0, Cp - C))).astype(compute_dtype)
    b_p = jnp.pad(params['b'], (0, Cp - C)).astype(jnp.float32).reshape(1, Cp)

    kernel = functools.partial(_ph_frame_kernel,
                               inv_temp=1.0 / temp, clamp_val=16.0)

    out = pl.pallas_call(
        kernel,
        grid=(BTp // rows,),
        in_specs=[
            pl.BlockSpec((rows, Hp), lambda i: (i, 0)),   # feat row tile
            pl.BlockSpec((Hp, Cp), lambda i: (0, 0)),     # weight (constant block)
            pl.BlockSpec((1, Cp), lambda i: (0, 0)),      # bias   (constant block)
        ],
        out_specs=pl.BlockSpec((rows, Cp), lambda i: (i, 0)),
        out_shape=jax.ShapeDtypeStruct((BTp, Cp), jnp.float32),
        compiler_params=pltpu.CompilerParams(
            dimension_semantics=("parallel",),
            vmem_limit_bytes=32 * 1024 * 1024),
    )(feat2d, w_p, b_p)

    # lane-dense slab -> PyTorch-shaped views (cheap XLA slices, outside kernel)
    logits = out[:BT].reshape(B, T, Cp)
    ph_bd_logits = logits[..., 0]            # [B, T], already /temp + clamped
    ph_frame_logits = logits[..., 1:C]       # [B, T, C-1], already /temp
    return ph_bd_logits, ph_frame_logits


if __name__ == "__main__":
    hparams = dict(
        hidden_size=32,
        dropout=0.0,
        ph_num=58,
        ph_bd_temperature=1.0,
    )
    B, T = 2, 16
    H = hparams['hidden_size']
    C = hparams['ph_num'] + 3

    key = jax.random.PRNGKey(0)
    k_feat, k_par = jax.random.split(key)
    feat = jax.random.normal(k_feat, (B, T, H), jnp.float32)
    params = init_params(k_par, H, C)

    ph_bd_logits, ph_frame_logits = ph_frame_predictor_forward(
        feat, params, hparams, train=False)
    jax.block_until_ready((ph_bd_logits, ph_frame_logits))

    assert ph_bd_logits.shape == (B, T)
    assert ph_frame_logits.shape == (B, T, C - 1)

    # reference with the same bf16 operand cast (f32 accumulation)
    temp = max(1e-7, hparams['ph_bd_temperature'])
    fb = feat.reshape(B * T, H).astype(jnp.bfloat16)
    wb = params['w'].astype(jnp.bfloat16)
    ref = (jnp.dot(fb, wb, preferred_element_type=jnp.float32)
           + params['b'][None, :]) / temp
    ref = ref.reshape(B, T, C)
    ref_bd = jnp.clip(ref[..., 0], -16.0, 16.0)
    ref_frame = ref[..., 1:]
    err = max(float(jnp.max(jnp.abs(ph_bd_logits - ref_bd))),
              float(jnp.max(jnp.abs(ph_frame_logits - ref_frame))))
    assert err < 5e-3, f"mismatch vs reference: {err}"

    print("KERNEL_OK")
</pallas_src>

<mosaic_0001>
module attributes {stable_mosaic.version = 11 : i64} {
  func.func @_ph_frame_kernel(%arg0: i32, %arg1: memref<32x128xbf16, #tpu.memory_space<vmem>>, %arg2: memref<128x128xbf16, #tpu.memory_space<vmem>>, %arg3: memref<1x128xf32, #tpu.memory_space<vmem>>, %arg4: memref<32x128xf32, #tpu.memory_space<vmem>>) attributes {dimension_semantics = [#tpu.dimension_semantics<parallel>], iteration_bounds = array<i64: 1>, scalar_prefetch = 0 : i64, scratch_operands = 0 : i64, tpu.core_type = #tpu.core_type<tc>, window_params = [{transform_indices = @transform_0, window_bounds = array<i64: 32, 128>}, {pipeline_mode = #tpu.pipeline_mode<synchronous>, transform_indices = @transform_1, window_bounds = array<i64: 128, 128>}, {pipeline_mode = #tpu.pipeline_mode<synchronous>, transform_indices = @transform_2, window_bounds = array<i64: 1, 128>}, {transform_indices = @transform_3, window_bounds = array<i64: 32, 128>}]} {
    %c0 = arith.constant 0 : index
    %c0_0 = arith.constant 0 : index
    %0 = vector.load %arg1[%c0, %c0_0] : memref<32x128xbf16, #tpu.memory_space<vmem>>, vector<32x128xbf16>
    %c0_1 = arith.constant 0 : index
    %c0_2 = arith.constant 0 : index
    %1 = vector.load %arg2[%c0_1, %c0_2] : memref<128x128xbf16, #tpu.memory_space<vmem>>, vector<128x128xbf16>
    %cst = arith.constant dense<0.000000e+00> : vector<32x128xf32>
    %2 = tpu.matmul %0, %1, %cst {dimension_numbers = #tpu.dot_dimension_numbers<[1], [0], [0], [1], [0, 0, 1, 1], [], []>} : vector<32x128xbf16>, vector<128x128xbf16>, vector<32x128xf32> -> vector<32x128xf32>
    %c0_3 = arith.constant 0 : index
    %c0_4 = arith.constant 0 : index
    %3 = vector.load %arg3[%c0_3, %c0_4] : memref<1x128xf32, #tpu.memory_space<vmem>>, vector<1x128xf32>
    %4 = vector.broadcast %3 : vector<1x128xf32> to vector<32x128xf32>
    %5 = arith.addf %2, %4 : vector<32x128xf32>
    %cst_5 = arith.constant 1.000000e+00 : f32
    %6 = vector.broadcast %cst_5 : f32 to vector<32x128xf32>
    %7 = arith.mulf %5, %6 : vector<32x128xf32>
    %8 = tpu.iota {dimensions = array<i32: 1>} : vector<32x128xi32>
    %cst_6 = arith.constant -1.600000e+01 : f32
    %cst_7 = arith.constant 1.600000e+01 : f32
    %9 = vector.broadcast %cst_6 : f32 to vector<32x128xf32>
    %10 = arith.maximumf %9, %7 : vector<32x128xf32>
    %11 = vector.broadcast %cst_7 : f32 to vector<32x128xf32>
    %12 = arith.minimumf %11, %10 : vector<32x128xf32>
    %c0_i32 = arith.constant 0 : i32
    %13 = vector.broadcast %c0_i32 : i32 to vector<32x128xi32>
    %14 = arith.cmpi eq, %8, %13 : vector<32x128xi32>
    %15 = arith.select %14, %12, %7 : vector<32x128xi1>, vector<32x128xf32>
    %c0_8 = arith.constant 0 : index
    %c0_9 = arith.constant 0 : index
    %16 = vector.load %arg4[%c0_8, %c0_9] : memref<32x128xf32, #tpu.memory_space<vmem>>, vector<32x128xf32>
    tpu.vector_store %arg4[%c0_8, %c0_9], %15 {strides = array<i32>} : memref<32x128xf32, #tpu.memory_space<vmem>>, vector<32x128xf32>,
    return
  }
  func.func @transform_0(%arg0: i32) -> (i32, i32) {
    %c0_i32 = arith.constant 0 : i32
    %c0_i32_0 = arith.constant 0 : i32
    return %arg0, %c0_i32 : i32, i32
  }
  func.func @transform_1(%arg0: i32) -> (i32, i32) {
    %c0_i32 = arith.constant 0 : i32
    %c0_i32_0 = arith.constant 0 : i32
    %c0_i32_1 = arith.constant 0 : i32
    return %c0_i32, %c0_i32_0 : i32, i32
  }
  func.func @transform_2(%arg0: i32) -> (i32, i32) {
    %c0_i32 = arith.constant 0 : i32
    %c0_i32_0 = arith.constant 0 : i32
    %c0_i32_1 = arith.constant 0 : i32
    return %c0_i32, %c0_i32_0 : i32, i32
  }
  func.func @transform_3(%arg0: i32) -> (i32, i32) {
    %c0_i32 = arith.constant 0 : i32
    %c0_i32_0 = arith.constant 0 : i32
    return %arg0, %c0_i32 : i32, i32
  }
}

</mosaic_0001>

<llo_original>
// kernel: tpu_custom_call.1
$region0: #{tpu_custom_call.1}
  #allocation0 [shape = 'u32[]', space=smem, size = 0x4, offset = 0x4, fixed_abs, tag = 'smem constant byte address 0x4 - core index']
  #allocation1 [shape = 'u32[144,128]{1,0:T(1,128)}', space=vmem, size = 0x12000, scoped, tag = 'internal scratch']
  %s0 = inlined_call_operand.hbm [shape: bf16[32,128], index: 0, kind: input, shape index: {}]
  %s1 = inlined_call_operand.hbm [shape: bf16[128,128], index: 1, kind: input, shape index: {}]
  %s2 = inlined_call_operand.vmem [shape: f32[1,128], index: 2, kind: input, shape index: {}]
  %s3 = inlined_call_operand.hbm [shape: f32[32,128], index: 3, kind: output, shape index: {}]
  %s4 = sld [smem:[#allocation0]]
  $region30: #{tpu_custom_call.1} parent=0
    _
  %s6 = ssub.s32 1, %s4
  %s7 = scalar_select 0, %s6, %s4
  $region1: #{tpu_custom_call.1} parent=0
    #allocation2 [shape = 'u8[8192]{0}', space=vmem, size = 0x2000, scoped, tag = 'input window, operand 0, single buffered']
    #allocation3 [shape = 's32[1]{0}', space=sflag, size = 0x4, scoped, tag = 'scoped memory for tpu_custom_call.1']
    #allocation4 [shape = 's32[1]{0}', space=sflag, size = 0x4, scoped, tag = 'scoped memory for tpu_custom_call.1']
    #allocation5 [shape = 'u8[32768]{0}', space=vmem, size = 0x8000, scoped, tag = 'input window, operand 1, single buffered']
    #allocation6 [shape = 's32[1]{0}', space=sflag, size = 0x4, scoped, tag = 'scoped memory for tpu_custom_call.1']
    #allocation7 [shape = 'u8[16384]{0}', space=vmem, size = 0x4000, scoped, tag = 'output window, operand 0, single buffered']
    %8 = vsyncpa [#allocation3], 0
    %9 = vsyncpa [#allocation6], 0
    %10 = vsyncpa [#allocation4], 0
    // Predicated region
    $region2: #{tpu_custom_call.1} parent=1 // pred_check
      _
    $region3: #{tpu_custom_call.1} parent=1 // pred_check_branch
      %12 = sbr.rel (0) target = $region5
    $region4: #{tpu_custom_call.1} parent=1 // pred_region
      %s14 = ssub.s32 256, 256
      %15 = vsyncadd [#allocation3], %s14
      %s16 = sshll.u32 [#allocation2], 4
      %s17 = int_to_ptr.vmem [resolvable:$true] %s16
      %22 = dma.hbm_to_vmem [thread:$0]  %s0, 256, %s17, [#allocation3], 64, 64, 4
    $region5: #{tpu_custom_call.1} parent=1 // pred_fallthru
      _
    // Predicated region
    $region6: #{tpu_custom_call.1} parent=1 // pred_check
      _
    $region7: #{tpu_custom_call.1} parent=1 // pred_check_branch
      %24 = sbr.rel (0) target = $region9
    $region8: #{tpu_custom_call.1} parent=1 // pred_region
      %s26 = ssub.s32 1024, 1024
      %27 = vsyncadd [#allocation6], %s26
      %s28 = sshll.u32 [#allocation5], 4
      %s29 = int_to_ptr.vmem [resolvable:$true] %s28
      %34 = dma.hbm_to_vmem [thread:$0]  %s1, 1024, %s29, [#allocation6], 64, 64, 4
    $region9: #{tpu_custom_call.1} parent=1 // pred_fallthru
      _
    // Predicated region
    $region10: #{tpu_custom_call.1} parent=1 // pred_check
      _
    $region11: #{tpu_custom_call.1} parent=1 // pred_check_branch
      %36 = sbr.rel (0) target = $region13
    $region12: #{tpu_custom_call.1} parent=1 // pred_region
      _
    $region13: #{tpu_custom_call.1} parent=1 // pred_fallthru
      _
    // Predicated region
    $region14: #{tpu_custom_call.1} parent=1 // pred_check
      _
    $region15: #{tpu_custom_call.1} parent=1 // pred_check_branch
      %38 = sbr.rel (0) target = $region17
    $region16: #{tpu_custom_call.1} parent=1 // pred_region
      %39 = dma.done [#allocation3], 256
    $region17: #{tpu_custom_call.1} parent=1 // pred_fallthru
      _
    // Predicated region
    $region18: #{tpu_custom_call.1} parent=1 // pred_check
      _
    $region19: #{tpu_custom_call.1} parent=1 // pred_check_branch
      %41 = sbr.rel (0) target = $region21
    $region20: #{tpu_custom_call.1} parent=1 // pred_region
      %42 = dma.done [#allocation6], 1024
    $region21: #{tpu_custom_call.1} parent=1 // pred_fallthru
      _
    %v44 = vld [vmem:[#allocation2] sm:$0xf]
    %v45 = vld [vmem:[#allocation2 + $0x4] sm:$0xf]
    %v46 = vld [vmem:[#allocation2 + $0x8] sm:$0xf]
    %v47 = vld [vmem:[#allocation2 + $0xc] sm:$0xf]
    %v48 = vld [vmem:[#allocation5] sm:$0xf]
    %v49 = vld [vmem:[#allocation5 + $0x4] sm:$0xf]
    %v50 = vld [vmem:[#allocation5 + $0x8] sm:$0xf]
    %v51 = vld [vmem:[#allocation5 + $0xc] sm:$0xf]
    %v52 = vld [vmem:[#allocation5 + $0x10] sm:$0xf]
    %v53 = vld [vmem:[#allocation5 + $0x14] sm:$0xf]
    %v54 = vld [vmem:[#allocation5 + $0x18] sm:$0xf]
    %v55 = vld [vmem:[#allocation5 + $0x1c] sm:$0xf]
    %v56 = vld [vmem:[#allocation5 + $0x20] sm:$0xf]
    %v57 = vld [vmem:[#allocation5 + $0x24] sm:$0xf]
    %v58 = vld [vmem:[#allocation5 + $0x28] sm:$0xf]
    %v59 = vld [vmem:[#allocation5 + $0x2c] sm:$0xf]
    %v60 = vld [vmem:[#allocation5 + $0x30] sm:$0xf]
    %v61 = vld [vmem:[#allocation5 + $0x34] sm:$0xf]
    %v62 = vld [vmem:[#allocation5 + $0x38] sm:$0xf]
    %v63 = vld [vmem:[#allocation5 + $0x3c] sm:$0xf]
    %v64 = vld [vmem:[%s2] sm:$0x1]
    %v66 = vlaneseq
    %v67 = vshrl.u32 %v66, 7
    %v68 = vsub.s32 0, %v67
    %v69 = vrot.slane %v64, %v68
    %v75 = vunpack.c.l.b16 %v44
    %v76 = vunpack.c.l.b16 %v45
    %v77 = vunpack.c.l.b16 %v46
    %v78 = vunpack.c.l.b16 %v47
    %v79 = vpack.c.b16 %v76, %v75
    %v80 = vpack.c.b16 %v78, %v77
    %v99 = vunpack.c.l.b16 %v48
    %v100 = vunpack.c.l.b16 %v49
    %v101 = vunpack.c.l.b16 %v50
    %v102 = vunpack.c.l.b16 %v51
    %v103 = vunpack.c.l.b16 %v52
    %v104 = vunpack.c.l.b16 %v53
    %v105 = vunpack.c.l.b16 %v54
    %v106 = vunpack.c.l.b16 %v55
    %v107 = vunpack.c.l.b16 %v56
    %v108 = vunpack.c.l.b16 %v57
    %v109 = vunpack.c.l.b16 %v58
    %v110 = vunpack.c.l.b16 %v59
    %v111 = vunpack.c.l.b16 %v60
    %v112 = vunpack.c.l.b16 %v61
    %v113 = vunpack.c.l.b16 %v62
    %v114 = vunpack.c.l.b16 %v63
    %v115 = vpack.c.b16 %v100, %v99
    %v116 = vpack.c.b16 %v102, %v101
    %v117 = vpack.c.b16 %v104, %v103
    %v118 = vpack.c.b16 %v106, %v105
    %v119 = vpack.c.b16 %v108, %v107
    %v120 = vpack.c.b16 %v110, %v109
    %v121 = vpack.c.b16 %v112, %v111
    %v122 = vpack.c.b16 %v114, %v113
    %131 = vmatprep.subr.bf16.mxu0 0
    %132 = vmatpush1.bf16.msra.mxu0 %v122
    %133 = vmatprep.subr.bf16.mxu0 0
    %134 = vmatpush1.bf16.msra.mxu0 %v121
    %135 = vmatprep.subr.bf16.mxu0 0
    %136 = vmatpush1.bf16.msra.mxu0 %v120
    %137 = vmatprep.subr.bf16.mxu0 0
    %138 = vmatpush1.bf16.msra.mxu0 %v119
    %139 = vmatprep.subr.bf16.mxu0 0
    %140 = vmatpush1.bf16.msra.mxu0 %v118
    %141 = vmatprep.subr.bf16.mxu0 0
    %142 = vmatpush1.bf16.msra.mxu0 %v117
    %143 = vmatprep.subr.bf16.mxu0 0
    %144 = vmatpush1.bf16.msra.mxu0 %v116
    %145 = vmatprep.subr.bf16.mxu0 0
    %146 = vmatpush1.bf16.msra.mxu0 %v115
    %147 = vmatprep.subr.bf16.mxu0 0
    %148 = vmatpush2.bf16.msra.mxu0 0
    %149 = vmatprep.subr.bf16.mxu0 0
    %150 = vmatpush2.bf16.msra.mxu0 0
    %151 = vmatprep.subr.bf16.mxu0 0
    %152 = vmatpush2.bf16.msra.mxu0 0
    %153 = vmatprep.subr.bf16.mxu0 0
    %154 = vmatpush2.bf16.msra.mxu0 0
    %155 = vmatprep.subr.bf16.mxu0 0
    %156 = vmatpush2.bf16.msra.mxu0 0
    %157 = vmatprep.subr.bf16.mxu0 0
    %158 = vmatpush2.bf16.msra.mxu0 0
    %159 = vmatprep.subr.bf16.mxu0 0
    %160 = vmatpush2.bf16.msra.mxu0 0
    %161 = vmatprep.subr.bf16.mxu0 0
    %162 = vmatpush2.bf16.msra.mxu0 0
    %163 = vmatprep.mubr.bf16.mxu0 0
    %164 = vmatmul.mubr.bf16.gmra.mxu0 %v79
    %v165 = vpop.f32.mrf.mxu0
    %v166 = vadd.f32 %v69, %v165
    %v167 = vpop.f32.mrf.mxu0
    %v168 = vpop.f32.mrf.mxu0
    %v169 = vadd.f32 %v69, %v168
    %v170 = vpop.f32.mrf.mxu0
    %171 = vmatprep.mubr.bf16.mxu0 0
    %172 = vmatmul.mubr.bf16.gmra.mxu0 %v80
    %v173 = vpop.f32.mrf.mxu0
    %v174 = vadd.f32 %v69, %v173
    %v175 = vpop.f32.mrf.mxu0
    %v176 = vpop.f32.mrf.mxu0
    %v177 = vadd.f32 %v69, %v176
    %v178 = vpop.f32.mrf.mxu0
    %179 = vdwg.mxu0
    %v180 = vlaneseq
    %v181 = vand.u32 %v180, 127
    %v182 = vmax.f32 %v166, -16.0
    %v183 = vmax.f32 %v169, -16.0
    %v184 = vmax.f32 %v174, -16.0
    %v185 = vmax.f32 %v177, -16.0
    %v186 = vmin.f32 %v182, 16.0
    %v187 = vmin.f32 %v183, 16.0
    %v188 = vmin.f32 %v184, 16.0
    %v189 = vmin.f32 %v185, 16.0
    %vm190 = vcmp.eq.s32.totalorder %v181, 0
    %v191 = vsel %vm190, %v186, %v166
    %v192 = vsel %vm190, %v187, %v169
    %v193 = vsel %vm190, %v188, %v174
    %v194 = vsel %vm190, %v189, %v177
    %195 = vst [vmem:[#allocation7] sm:$0xff] %v191
    %196 = vst [vmem:[#allocation7 + $0x8] sm:$0xff] %v192
    %197 = vst [vmem:[#allocation7 + $0x10] sm:$0xff] %v193
    %198 = vst [vmem:[#allocation7 + $0x18] sm:$0xff] %v194
    // Predicated region
    $region22: #{tpu_custom_call.1} parent=1 // pred_check
      _
    $region23: #{tpu_custom_call.1} parent=1 // pred_check_branch
      %200 = sbr.rel (0) target = $region25
    $region24: #{tpu_custom_call.1} parent=1 // pred_region
      %s202 = ssub.s32 512, 512
      %203 = vsyncadd [#allocation4], %s202
      %s204 = sshll.u32 [#allocation7], 4
      %s205 = int_to_ptr.vmem [resolvable:$true] %s204
      %210 = dma.vmem_to_hbm [thread:$0]  %s205, 512, %s3, [#allocation4], 128, 128, 8
    $region25: #{tpu_custom_call.1} parent=1 // pred_fallthru
      _
    // Predicated region
    $region26: #{tpu_custom_call.1} parent=1 // pred_check
      _
    $region27: #{tpu_custom_call.1} parent=1 // pred_check_branch
      %212 = sbr.rel (0) target = $region29
    $region28: #{tpu_custom_call.1} parent=1 // pred_region
      %213 = dma.done [#allocation4], 512
    $region29: #{tpu_custom_call.1} parent=1 // pred_fallthru
      _
    %214 = vsyncpa [#allocation3], 1
    %215 = vsyncpa [#allocation6], 1
    %216 = vsyncpa [#allocation4], 1

</llo_original>
